<compile_context>
chip_gen: v5e
topology: v5e:2x2
jax: 0.10.0
libtpu: 0.0.40
codegen_flags: <defaults>
</compile_context>

<pallas_src>
import jax
import jax.numpy as jnp
from jax import lax
from jax.experimental import pallas as pl
from jax.experimental.pallas import tpu as pltpu

# ---- "my_*" globals of the original script (small synthetic config) --------
MY_PROTOTYPE_SHAPE = (8, 32, 1, 1)        # (num_prototypes, proto_channels, 1, 1)
MY_NUM_CLASSES = 10
MY_PROTOTYPE_ACTIVATION_FUNCTION = "log"  # not used on the forward path
MY_ADD_ON_LAYERS_TYPE = "regular"

B, C_IN, H, W = 2, 4, 8, 8
C_FEAT = 16                               # stub backbone out_channels
P0, P1 = MY_PROTOTYPE_SHAPE[0], MY_PROTOTYPE_SHAPE[1]
HW = H * W
FEATURE_WIDTH = H                         # proto_layer_rf_info[0]
NUM_CLASSES = MY_NUM_CLASSES


# ---------------------------- Pallas kernel ---------------------------------
# Layout convention inside the kernel: channels on sublanes, pixels on lanes.
#   x_ref     : (C_IN,  T)   one tile of pixel columns (T = tile_rows)
#   w*_ref    : (out, in)    1x1-conv weights in PyTorch (out_ch, in_ch) layout
#   b*_ref    : (out, 1)
#   pcat_ref  : (P0+1, P1)   rows 0..P0-1 = L2-normalized prototypes,
#                            row P0       = their sum (folded sims-sum reduction)
# Outputs (all lane-dense, last dim = T):
#   feat_ref  : (P1, T)   add_on_layers output (sigmoid features)
#   sim_ref   : (P0, T)   1 + cosine similarities
#   wfeat_ref : (P1, T)   feat * sum_p sims[p]   (last-Linear input, pre-flatten)
def _ppnet_kernel(x_ref, wf_ref, bf_ref, w1_ref, b1_ref, w2_ref, b2_ref,
                  pcat_ref, feat_ref, sim_ref, wfeat_ref):
    x = x_ref[...]                                                        # (C_IN, T)

    # backbone stub ("features"): 1x1 conv + ReLU
    f0 = jnp.maximum(
        jnp.dot(wf_ref[...], x, preferred_element_type=jnp.float32) + bf_ref[...], 0.0)

    # add_on_layers: Conv1x1 -> ReLU -> Conv1x1 -> Sigmoid (tanh form -> EUP slot)
    a1 = jnp.maximum(
        jnp.dot(w1_ref[...], f0, preferred_element_type=jnp.float32) + b1_ref[...], 0.0)
    a2 = jnp.dot(w2_ref[...], a1, preferred_element_type=jnp.float32) + b2_ref[...]
    feat = 0.5 * jnp.tanh(0.5 * a2) + 0.5                                 # sigmoid(a2)
    feat_ref[...] = feat                                                  # (P1, T)

    # _calculate_cos_sim: 1 + <feat, p_n> / max(||feat||, eps), p_n pre-normalized.
    # One matmul gives both the per-prototype dots and the summed-prototype dot.
    dots_all = jnp.dot(pcat_ref[...], feat,
                       preferred_element_type=jnp.float32)                # (P0+1, T)
    sumsq = jnp.sum(feat * feat, axis=0, keepdims=True)                   # (1, T)
    inv_norm = lax.rsqrt(jnp.maximum(sumsq, 1e-16))                       # EUP rsqrt
    sims = 1.0 + dots_all[:P0, :] * inv_norm                              # (P0, T)
    sim_ref[...] = sims

    # weighted_features.sum(dim=1) == feat * sum_p sims[p]
    #   sum_p sims[p] = P0 + <feat, sum_p p_n[p]> / ||feat||   (folded reduction)
    sim_sum = float(P0) + dots_all[P0:P0 + 1, :] * inv_norm                # (1, T)
    wfeat_ref[...] = feat * sim_sum                                        # (P1, T)


# ------------------------------- wrapper ------------------------------------
def ppnet_forward(input_img, params, *, tile_rows=None):
    """input_img: NCHW float32 (B, C_IN, H, W). Returns (extracted, similarities, logits)."""
    Bn, Ci, Hh, Ww = input_img.shape
    n_rows = Bn * Hh * Ww
    if tile_rows is None:
        # Per-tile VMEM is tiny (~0.3 KB/row double-buffered), so a 4096-row tile
        # fits comfortably on v5e/v6e (128 MiB VMEM) and v7x (64 MiB).
        tile_rows = n_rows if n_rows <= 4096 else 4096
    assert n_rows % tile_rows == 0
    assert tile_rows == n_rows or tile_rows % 128 == 0
    grid = (n_rows // tile_rows,)

    # NCHW -> channels-on-sublanes / pixels-on-lanes (layout glue only):
    # column index n = b*HW + h*W + w.
    x_t = jnp.transpose(input_img, (1, 0, 2, 3)).reshape(Ci, n_rows)

    def full_spec(arr):
        nd = arr.ndim
        return pl.BlockSpec(arr.shape, lambda i, _nd=nd: (0,) * _nd)

    in_specs = [
        pl.BlockSpec((Ci, tile_rows), lambda i: (0, i)),                   # x columns
        full_spec(params["w_feat"]), full_spec(params["b_feat"]),
        full_spec(params["w_a1"]), full_spec(params["b_a1"]),
        full_spec(params["w_a2"]), full_spec(params["b_a2"]),
        full_spec(params["proto_cat"]),
    ]
    out_shapes = (jax.ShapeDtypeStruct((P1, n_rows), jnp.float32),         # features^T
                  jax.ShapeDtypeStruct((P0, n_rows), jnp.float32),         # similarities^T
                  jax.ShapeDtypeStruct((P1, n_rows), jnp.float32))         # weighted feats^T
    out_specs = (pl.BlockSpec((P1, tile_rows), lambda i: (0, i)),
                 pl.BlockSpec((P0, tile_rows), lambda i: (0, i)),
                 pl.BlockSpec((P1, tile_rows), lambda i: (0, i)))

    feat_t, sims_t, wfeat_t = pl.pallas_call(
        _ppnet_kernel,
        out_shape=out_shapes,
        grid=grid,
        in_specs=in_specs,
        out_specs=out_specs,
        # Every output block depends only on its own tile -> row axis is parallel
        # (megacore-shardable on v7x).
        compiler_params=pltpu.CompilerParams(dimension_semantics=("parallel",)),
    )(x_t, params["w_feat"], params["b_feat"], params["w_a1"], params["b_a1"],
      params["w_a2"], params["b_a2"], params["proto_cat"])

    # layout glue back to PyTorch's NCHW conventions
    extracted = jnp.transpose(feat_t.reshape(P1, Bn, Hh, Ww), (1, 0, 2, 3))
    similarities = jnp.transpose(sims_t.reshape(P0, Bn, Hh, Ww), (1, 0, 2, 3))

    # Unfused bias-free last Linear (single small XLA matmul):
    # PyTorch flattens weighted_features as NCHW -> index c*HW + h*W + w.
    last_in = jnp.transpose(wfeat_t.reshape(P1, Bn, Hh * Ww), (1, 0, 2)).reshape(Bn, -1)
    logits = last_in @ params["w_last_t"]                                  # (B, K)
    return extracted, similarities, logits


# --------------------------- pure-JAX reference ------------------------------
def ppnet_reference(input_img, params):
    Bn, Ci, Hh, Ww = input_img.shape
    x = jnp.transpose(input_img, (0, 2, 3, 1)).reshape(-1, Ci)            # pixel rows
    f0 = jnp.maximum(x @ params["w_feat"].T + params["b_feat"][:, 0], 0.0)
    a1 = jnp.maximum(f0 @ params["w_a1"].T + params["b_a1"][:, 0], 0.0)
    feat = jax.nn.sigmoid(a1 @ params["w_a2"].T + params["b_a2"][:, 0])   # (N, P1)
    p_norm = params["proto_cat"][:P0]                                     # (P0, P1)
    fn = feat / jnp.maximum(
        jnp.sqrt(jnp.sum(feat * feat, axis=-1, keepdims=True)), 1e-8)
    sims = 1.0 + fn @ p_norm.T                                            # (N, P0)
    wfeat = feat * jnp.sum(sims, axis=-1, keepdims=True)                  # (N, P1)
    extracted = jnp.transpose(feat.reshape(Bn, Hh, Ww, P1), (0, 3, 1, 2))
    similarities = jnp.transpose(sims.reshape(Bn, Hh, Ww, P0), (0, 3, 1, 2))
    last_in = jnp.transpose(wfeat.reshape(Bn, Hh, Ww, P1), (0, 3, 1, 2)).reshape(Bn, -1)
    logits = last_in @ params["w_last_t"]
    return extracted, similarities, logits


# --------------------------- parameter init ----------------------------------
def init_params(key):
    ks = jax.random.split(key, 5)

    def kaiming_fan_out_conv1x1(k, c_out, c_in):
        # kaiming_normal_(mode='fan_out', relu): std = sqrt(2 / (c_out*1*1));
        # stored in PyTorch Conv2d (out_ch, in_ch) layout so the kernel does W @ x_T.
        std = (2.0 / c_out) ** 0.5
        return std * jax.random.normal(k, (c_out, c_in), jnp.float32)

    w_feat = kaiming_fan_out_conv1x1(ks[0], C_FEAT, C_IN)
    b_feat = jnp.zeros((C_FEAT, 1), jnp.float32)
    w_a1 = kaiming_fan_out_conv1x1(ks[1], P1, C_FEAT)
    b_a1 = jnp.zeros((P1, 1), jnp.float32)
    w_a2 = kaiming_fan_out_conv1x1(ks[2], P1, P1)
    b_a2 = jnp.zeros((P1, 1), jnp.float32)

    # prototype_vectors: first P0 rows of Q from QR of a random (P1, P1) matrix
    rm = jax.random.normal(ks[3], (P1, P1), jnp.float32)
    q, _ = jnp.linalg.qr(rm)
    protos = q[:P0].astype(jnp.float32)                                   # (P0, P1)

    # hoisted constants (prototypes are fixed per call): L2-normalized prototypes
    # plus their sum as one extra row -> a single in-kernel matmul covers both the
    # per-prototype cosine dots and the folded sims-sum reduction.
    p_norm = protos / jnp.maximum(
        jnp.sqrt(jnp.sum(protos * protos, axis=-1, keepdims=True)), 1e-12)
    proto_cat = jnp.concatenate(
        [p_norm, jnp.sum(p_norm, axis=0, keepdims=True)], axis=0)         # (P0+1, P1)

    # last_layer: Linear(P1 * feature_width**2 -> num_classes, bias=False),
    # kaiming_normal_(mode='fan_out'): std = sqrt(2 / num_classes).
    # Pre-transposed once; the matmul itself stays in XLA (unfused).
    in_dim = P1 * FEATURE_WIDTH ** 2
    std_last = (2.0 / MY_NUM_CLASSES) ** 0.5
    w_last = std_last * jax.random.normal(ks[4], (MY_NUM_CLASSES, in_dim), jnp.float32)
    w_last_t = jnp.transpose(w_last)                                      # (in_dim, K)

    return dict(w_feat=w_feat, b_feat=b_feat, w_a1=w_a1, b_a1=b_a1,
                w_a2=w_a2, b_a2=b_a2, proto_cat=proto_cat, w_last_t=w_last_t)


if __name__ == "__main__":
    key = jax.random.PRNGKey(0)
    pkey, xkey = jax.random.split(key)
    params = init_params(pkey)
    input_img = jax.random.normal(xkey, (B, C_IN, H, W), jnp.float32)     # NCHW

    extracted, similarities, logits = ppnet_forward(input_img, params)
    jax.block_until_ready((extracted, similarities, logits))

    assert extracted.shape == (B, P1, H, W)
    assert similarities.shape == (B, P0, H, W)
    assert logits.shape == (B, MY_NUM_CLASSES)
    assert bool(jnp.all(jnp.isfinite(logits)))

    # sanity vs pure-JAX reference (loose tol: EUP tanh-sigmoid/rsqrt + MXU f32 passes)
    ref_feat, ref_sims, ref_logits = ppnet_reference(input_img, params)
    assert bool(jnp.allclose(extracted, ref_feat, rtol=1e-2, atol=1e-3))
    assert bool(jnp.allclose(similarities, ref_sims, rtol=1e-2, atol=1e-3))
    assert bool(jnp.allclose(logits, ref_logits, rtol=1e-2, atol=1e-2))

    print("KERNEL_OK")
</pallas_src>

<mosaic_0001>
module attributes {stable_mosaic.version = 11 : i64} {
  func.func @_ppnet_kernel(%arg0: i32, %arg1: memref<4x128xf32, #tpu.memory_space<vmem>>, %arg2: memref<16x4xf32, #tpu.memory_space<vmem>>, %arg3: memref<16x1xf32, #tpu.memory_space<vmem>>, %arg4: memref<32x16xf32, #tpu.memory_space<vmem>>, %arg5: memref<32x1xf32, #tpu.memory_space<vmem>>, %arg6: memref<32x32xf32, #tpu.memory_space<vmem>>, %arg7: memref<32x1xf32, #tpu.memory_space<vmem>>, %arg8: memref<9x32xf32, #tpu.memory_space<vmem>>, %arg9: memref<32x128xf32, #tpu.memory_space<vmem>>, %arg10: memref<8x128xf32, #tpu.memory_space<vmem>>, %arg11: memref<32x128xf32, #tpu.memory_space<vmem>>) attributes {dimension_semantics = [#tpu.dimension_semantics<parallel>], iteration_bounds = array<i64: 1>, scalar_prefetch = 0 : i64, scratch_operands = 0 : i64, tpu.core_type = #tpu.core_type<tc>, window_params = [{transform_indices = @transform_0, window_bounds = array<i64: 4, 128>}, {pipeline_mode = #tpu.pipeline_mode<synchronous>, transform_indices = @transform_1, window_bounds = array<i64: 16, 4>}, {pipeline_mode = #tpu.pipeline_mode<synchronous>, transform_indices = @transform_2, window_bounds = array<i64: 16, 1>}, {pipeline_mode = #tpu.pipeline_mode<synchronous>, transform_indices = @transform_3, window_bounds = array<i64: 32, 16>}, {pipeline_mode = #tpu.pipeline_mode<synchronous>, transform_indices = @transform_4, window_bounds = array<i64: 32, 1>}, {pipeline_mode = #tpu.pipeline_mode<synchronous>, transform_indices = @transform_5, window_bounds = array<i64: 32, 32>}, {pipeline_mode = #tpu.pipeline_mode<synchronous>, transform_indices = @transform_6, window_bounds = array<i64: 32, 1>}, {pipeline_mode = #tpu.pipeline_mode<synchronous>, transform_indices = @transform_7, window_bounds = array<i64: 9, 32>}, {transform_indices = @transform_8, window_bounds = array<i64: 32, 128>}, {transform_indices = @transform_9, window_bounds = array<i64: 8, 128>}, {transform_indices = @transform_10, window_bounds = array<i64: 32, 128>}]} {
    %c0 = arith.constant 0 : index
    %c0_0 = arith.constant 0 : index
    %0 = vector.load %arg1[%c0, %c0_0] : memref<4x128xf32, #tpu.memory_space<vmem>>, vector<4x128xf32>
    %c0_1 = arith.constant 0 : index
    %c0_2 = arith.constant 0 : index
    %1 = vector.load %arg2[%c0_1, %c0_2] : memref<16x4xf32, #tpu.memory_space<vmem>>, vector<16x4xf32>
    %cst = arith.constant dense<0.000000e+00> : vector<16x128xf32>
    %2 = tpu.matmul %1, %0, %cst {dimension_numbers = #tpu.dot_dimension_numbers<[1], [0], [0], [1], [0, 0, 1, 1], [], []>} : vector<16x4xf32>, vector<4x128xf32>, vector<16x128xf32> -> vector<16x128xf32>
    %c0_3 = arith.constant 0 : index
    %c0_4 = arith.constant 0 : index
    %3 = vector.load %arg3[%c0_3, %c0_4] : memref<16x1xf32, #tpu.memory_space<vmem>>, vector<16x1xf32>
    %4 = vector.broadcast %3 : vector<16x1xf32> to vector<16x128xf32>
    %5 = arith.addf %2, %4 : vector<16x128xf32>
    %cst_5 = arith.constant 0.000000e+00 : f32
    %6 = vector.broadcast %cst_5 : f32 to vector<16x128xf32>
    %7 = arith.maximumf %5, %6 : vector<16x128xf32>
    %c0_6 = arith.constant 0 : index
    %c0_7 = arith.constant 0 : index
    %8 = vector.load %arg4[%c0_6, %c0_7] : memref<32x16xf32, #tpu.memory_space<vmem>>, vector<32x16xf32>
    %cst_8 = arith.constant dense<0.000000e+00> : vector<32x128xf32>
    %9 = tpu.matmul %8, %7, %cst_8 {dimension_numbers = #tpu.dot_dimension_numbers<[1], [0], [0], [1], [0, 0, 1, 1], [], []>} : vector<32x16xf32>, vector<16x128xf32>, vector<32x128xf32> -> vector<32x128xf32>
    %c0_9 = arith.constant 0 : index
    %c0_10 = arith.constant 0 : index
    %10 = vector.load %arg5[%c0_9, %c0_10] : memref<32x1xf32, #tpu.memory_space<vmem>>, vector<32x1xf32>
    %11 = vector.broadcast %10 : vector<32x1xf32> to vector<32x128xf32>
    %12 = arith.addf %9, %11 : vector<32x128xf32>
    %cst_11 = arith.constant 0.000000e+00 : f32
    %13 = vector.broadcast %cst_11 : f32 to vector<32x128xf32>
    %14 = arith.maximumf %12, %13 : vector<32x128xf32>
    %c0_12 = arith.constant 0 : index
    %c0_13 = arith.constant 0 : index
    %15 = vector.load %arg6[%c0_12, %c0_13] : memref<32x32xf32, #tpu.memory_space<vmem>>, vector<32x32xf32>
    %cst_14 = arith.constant dense<0.000000e+00> : vector<32x128xf32>
    %16 = tpu.matmul %15, %14, %cst_14 {dimension_numbers = #tpu.dot_dimension_numbers<[1], [0], [0], [1], [0, 0, 1, 1], [], []>} : vector<32x32xf32>, vector<32x128xf32>, vector<32x128xf32> -> vector<32x128xf32>
    %c0_15 = arith.constant 0 : index
    %c0_16 = arith.constant 0 : index
    %17 = vector.load %arg7[%c0_15, %c0_16] : memref<32x1xf32, #tpu.memory_space<vmem>>, vector<32x1xf32>
    %18 = vector.broadcast %17 : vector<32x1xf32> to vector<32x128xf32>
    %19 = arith.addf %16, %18 : vector<32x128xf32>
    %cst_17 = arith.constant 5.000000e-01 : f32
    %20 = vector.broadcast %cst_17 : f32 to vector<32x128xf32>
    %21 = arith.mulf %20, %19 : vector<32x128xf32>
    %22 = math.tanh %21 : vector<32x128xf32>
    %cst_18 = arith.constant 5.000000e-01 : f32
    %23 = vector.broadcast %cst_18 : f32 to vector<32x128xf32>
    %24 = arith.mulf %23, %22 : vector<32x128xf32>
    %cst_19 = arith.constant 5.000000e-01 : f32
    %25 = vector.broadcast %cst_19 : f32 to vector<32x128xf32>
    %26 = arith.addf %24, %25 : vector<32x128xf32>
    %c0_20 = arith.constant 0 : index
    %c0_21 = arith.constant 0 : index
    %27 = vector.load %arg9[%c0_20, %c0_21] : memref<32x128xf32, #tpu.memory_space<vmem>>, vector<32x128xf32>
    tpu.vector_store %arg9[%c0_20, %c0_21], %26 {strides = array<i32>} : memref<32x128xf32, #tpu.memory_space<vmem>>, vector<32x128xf32>,
    %c0_22 = arith.constant 0 : index
    %c0_23 = arith.constant 0 : index
    %28 = vector.load %arg8[%c0_22, %c0_23] : memref<9x32xf32, #tpu.memory_space<vmem>>, vector<9x32xf32>
    %cst_24 = arith.constant dense<0.000000e+00> : vector<9x128xf32>
    %29 = tpu.matmul %28, %26, %cst_24 {dimension_numbers = #tpu.dot_dimension_numbers<[1], [0], [0], [1], [0, 0, 1, 1], [], []>} : vector<9x32xf32>, vector<32x128xf32>, vector<9x128xf32> -> vector<9x128xf32>
    %30 = arith.mulf %26, %26 : vector<32x128xf32>
    %cst_25 = arith.constant dense<0.000000e+00> : vector<128xf32>
    %31 = vector.multi_reduction <add>, %30, %cst_25 [0] : vector<32x128xf32> to vector<128xf32>
    %32 = vector.shape_cast %31 : vector<128xf32> to vector<1x128xf32>
    %cst_26 = arith.constant 1.000000e-16 : f32
    %33 = vector.broadcast %cst_26 : f32 to vector<1x128xf32>
    %34 = arith.maximumf %32, %33 : vector<1x128xf32>
    %35 = math.rsqrt %34 : vector<1x128xf32>
    %36 = vector.extract_strided_slice %29 {offsets = [0, 0], sizes = [8, 128], strides = [1, 1]} : vector<9x128xf32> to vector<8x128xf32>
    %37 = vector.broadcast %35 : vector<1x128xf32> to vector<8x128xf32>
    %38 = arith.mulf %36, %37 : vector<8x128xf32>
    %cst_27 = arith.constant 1.000000e+00 : f32
    %39 = vector.broadcast %cst_27 : f32 to vector<8x128xf32>
    %40 = arith.addf %39, %38 : vector<8x128xf32>
    %c0_28 = arith.constant 0 : index
    %c0_29 = arith.constant 0 : index
    %41 = vector.load %arg10[%c0_28, %c0_29] : memref<8x128xf32, #tpu.memory_space<vmem>>, vector<8x128xf32>
    tpu.vector_store %arg10[%c0_28, %c0_29], %40 {strides = array<i32>} : memref<8x128xf32, #tpu.memory_space<vmem>>, vector<8x128xf32>,
    %42 = vector.extract_strided_slice %29 {offsets = [8, 0], sizes = [1, 128], strides = [1, 1]} : vector<9x128xf32> to vector<1x128xf32>
    %43 = arith.mulf %42, %35 : vector<1x128xf32>
    %cst_30 = arith.constant 8.000000e+00 : f32
    %44 = vector.broadcast %cst_30 : f32 to vector<1x128xf32>
    %45 = arith.addf %44, %43 : vector<1x128xf32>
    %46 = vector.broadcast %45 : vector<1x128xf32> to vector<32x128xf32>
    %47 = arith.mulf %26, %46 : vector<32x128xf32>
    %c0_31 = arith.constant 0 : index
    %c0_32 = arith.constant 0 : index
    %48 = vector.load %arg11[%c0_31, %c0_32] : memref<32x128xf32, #tpu.memory_space<vmem>>, vector<32x128xf32>
    tpu.vector_store %arg11[%c0_31, %c0_32], %47 {strides = array<i32>} : memref<32x128xf32, #tpu.memory_space<vmem>>, vector<32x128xf32>,
    return
  }
  func.func @transform_0(%arg0: i32) -> (i32, i32) {
    %c0_i32 = arith.constant 0 : i32
    %c0_i32_0 = arith.constant 0 : i32
    return %c0_i32, %arg0 : i32, i32
  }
  func.func @transform_1(%arg0: i32) -> (i32, i32) {
    %c0_i32 = arith.constant 0 : i32
    %c0_i32_0 = arith.constant 0 : i32
    %c0_i32_1 = arith.constant 0 : i32
    return %c0_i32, %c0_i32_0 : i32, i32
  }
  func.func @transform_2(%arg0: i32) -> (i32, i32) {
    %c0_i32 = arith.constant 0 : i32
    %c0_i32_0 = arith.constant 0 : i32
    %c0_i32_1 = arith.constant 0 : i32
    return %c0_i32, %c0_i32_0 : i32, i32
  }
  func.func @transform_3(%arg0: i32) -> (i32, i32) {
    %c0_i32 = arith.constant 0 : i32
    %c0_i32_0 = arith.constant 0 : i32
    %c0_i32_1 = arith.constant 0 : i32
    return %c0_i32, %c0_i32_0 : i32, i32
  }
  func.func @transform_4(%arg0: i32) -> (i32, i32) {
    %c0_i32 = arith.constant 0 : i32
    %c0_i32_0 = arith.constant 0 : i32
    %c0_i32_1 = arith.constant 0 : i32
    return %c0_i32, %c0_i32_0 : i32, i32
  }
  func.func @transform_5(%arg0: i32) -> (i32, i32) {
    %c0_i32 = arith.constant 0 : i32
    %c0_i32_0 = arith.constant 0 : i32
    %c0_i32_1 = arith.constant 0 : i32
    return %c0_i32, %c0_i32_0 : i32, i32
  }
  func.func @transform_6(%arg0: i32) -> (i32, i32) {
    %c0_i32 = arith.constant 0 : i32
    %c0_i32_0 = arith.constant 0 : i32
    %c0_i32_1 = arith.constant 0 : i32
    return %c0_i32, %c0_i32_0 : i32, i32
  }
  func.func @transform_7(%arg0: i32) -> (i32, i32) {
    %c0_i32 = arith.constant 0 : i32
    %c0_i32_0 = arith.constant 0 : i32
    %c0_i32_1 = arith.constant 0 : i32
    return %c0_i32, %c0_i32_0 : i32, i32
  }
  func.func @transform_8(%arg0: i32) -> (i32, i32) {
    %c0_i32 = arith.constant 0 : i32
    %c0_i32_0 = arith.constant 0 : i32
    return %c0_i32, %arg0 : i32, i32
  }
  func.func @transform_9(%arg0: i32) -> (i32, i32) {
    %c0_i32 = arith.constant 0 : i32
    %c0_i32_0 = arith.constant 0 : i32
    return %c0_i32, %arg0 : i32, i32
  }
  func.func @transform_10(%arg0: i32) -> (i32, i32) {
    %c0_i32 = arith.constant 0 : i32
    %c0_i32_0 = arith.constant 0 : i32
    return %c0_i32, %arg0 : i32, i32
  }
}

</mosaic_0001>

<llo_original>
// kernel: tpu_custom_call.1
$region0: #{tpu_custom_call.1}
  #allocation0 [shape = 'u32[]', space=smem, size = 0x4, offset = 0x4, fixed_abs, tag = 'smem constant byte address 0x4 - core index']
  #allocation1 [shape = 'u32[72,128]{1,0:T(1,128)}', space=vmem, size = 0x9000, scoped, tag = 'internal scratch']
  %s0 = inlined_call_operand.vmem [shape: f32[4,128], index: 0, kind: input, shape index: {}]
  %s1 = inlined_call_operand.vmem [shape: f32[16,4], index: 1, kind: input, shape index: {}]
  %s2 = inlined_call_operand.vmem [shape: f32[16,1], index: 2, kind: input, shape index: {}]
  %s3 = inlined_call_operand.vmem [shape: f32[32,16], index: 3, kind: input, shape index: {}]
  %s4 = inlined_call_operand.vmem [shape: f32[32,1], index: 4, kind: input, shape index: {}]
  %s5 = inlined_call_operand.vmem [shape: f32[32,32], index: 5, kind: input, shape index: {}]
  %s6 = inlined_call_operand.vmem [shape: f32[32,1], index: 6, kind: input, shape index: {}]
  %s7 = inlined_call_operand.vmem [shape: f32[9,32], index: 7, kind: input, shape index: {}]
  %s8 = inlined_call_operand.hbm [shape: f32[32,128], index: 8, kind: output, shape index: {0}]
  %s9 = inlined_call_operand.hbm [shape: f32[8,128], index: 9, kind: output, shape index: {1}]
  %s10 = inlined_call_operand.hbm [shape: f32[32,128], index: 10, kind: output, shape index: {2}]
  %11 = xla_tuple %s8, %s9, %s10
  %s12 = sld [smem:[#allocation0]]
  $region58: #{tpu_custom_call.1} parent=0
    _
  %s14 = ssub.s32 1, %s12
  %s15 = scalar_select 0, %s14, %s12
  $region1: #{tpu_custom_call.1} parent=0
    #allocation2 [shape = 'u8[16384]{0}', space=vmem, size = 0x4000, scoped, tag = 'output window, operand 0, single buffered']
    #allocation3 [shape = 's32[1]{0}', space=sflag, size = 0x4, scoped, tag = 'scoped memory for tpu_custom_call.1']
    #allocation4 [shape = 'u8[4096]{0}', space=vmem, size = 0x1000, scoped, tag = 'output window, operand 1, single buffered']
    #allocation5 [shape = 's32[1]{0}', space=sflag, size = 0x4, scoped, tag = 'scoped memory for tpu_custom_call.1']
    #allocation6 [shape = 'u8[16384]{0}', space=vmem, size = 0x4000, scoped, tag = 'output window, operand 2, single buffered']
    %16 = vsyncpa [#allocation3], 0
    %17 = vsyncpa [#allocation5], 0
    // Predicated region
    $region2: #{tpu_custom_call.1} parent=1 // pred_check
      _
    $region3: #{tpu_custom_call.1} parent=1 // pred_check_branch
      %19 = sbr.rel (0) target = $region5
    $region4: #{tpu_custom_call.1} parent=1 // pred_region
      _
    $region5: #{tpu_custom_call.1} parent=1 // pred_fallthru
      _
    // Predicated region
    $region6: #{tpu_custom_call.1} parent=1 // pred_check
      _
    $region7: #{tpu_custom_call.1} parent=1 // pred_check_branch
      %21 = sbr.rel (0) target = $region9
    $region8: #{tpu_custom_call.1} parent=1 // pred_region
      _
    $region9: #{tpu_custom_call.1} parent=1 // pred_fallthru
      _
    // Predicated region
    $region10: #{tpu_custom_call.1} parent=1 // pred_check
      _
    $region11: #{tpu_custom_call.1} parent=1 // pred_check_branch
      %23 = sbr.rel (0) target = $region13
    $region12: #{tpu_custom_call.1} parent=1 // pred_region
      _
    $region13: #{tpu_custom_call.1} parent=1 // pred_fallthru
      _
    // Predicated region
    $region14: #{tpu_custom_call.1} parent=1 // pred_check
      _
    $region15: #{tpu_custom_call.1} parent=1 // pred_check_branch
      %25 = sbr.rel (0) target = $region17
    $region16: #{tpu_custom_call.1} parent=1 // pred_region
      _
    $region17: #{tpu_custom_call.1} parent=1 // pred_fallthru
      _
    // Predicated region
    $region18: #{tpu_custom_call.1} parent=1 // pred_check
      _
    $region19: #{tpu_custom_call.1} parent=1 // pred_check_branch
      %27 = sbr.rel (0) target = $region21
    $region20: #{tpu_custom_call.1} parent=1 // pred_region
      _
    $region21: #{tpu_custom_call.1} parent=1 // pred_fallthru
      _
    // Predicated region
    $region22: #{tpu_custom_call.1} parent=1 // pred_check
      _
    $region23: #{tpu_custom_call.1} parent=1 // pred_check_branch
      %29 = sbr.rel (0) target = $region25
    $region24: #{tpu_custom_call.1} parent=1 // pred_region
      _
    $region25: #{tpu_custom_call.1} parent=1 // pred_fallthru
      _
    // Predicated region
    $region26: #{tpu_custom_call.1} parent=1 // pred_check
      _
    $region27: #{tpu_custom_call.1} parent=1 // pred_check_branch
      %31 = sbr.rel (0) target = $region29
    $region28: #{tpu_custom_call.1} parent=1 // pred_region
      _
    $region29: #{tpu_custom_call.1} parent=1 // pred_fallthru
      _
    // Predicated region
    $region30: #{tpu_custom_call.1} parent=1 // pred_check
      _
    $region31: #{tpu_custom_call.1} parent=1 // pred_check_branch
      %33 = sbr.rel (0) target = $region33
    $region32: #{tpu_custom_call.1} parent=1 // pred_region
      _
    $region33: #{tpu_custom_call.1} parent=1 // pred_fallthru
      _
    %v34 = vld [vmem:[%s0] sm:$0xf]
    %v35 = vld [vmem:[%s1] sm:$0xff]
    %v36 = vld [vmem:[%s1 + $0x8] sm:$0xff]
    %v37 = vld [vmem:[%s2] sm:$0xff]
    %v38 = vld [vmem:[%s2 + $0x8] sm:$0xff]
    %40 = vset.pattern.permute.xlu0 0
    %41 = vperm.xlu0 %40, %v37
    %v42 = vpop.permute.xlu0 %41
    %45 = vset.pattern.permute.xlu0 0
    %46 = vperm.xlu0 %45, %v38
    %v47 = vpop.permute.xlu0 %46
    %vm49 = vcmask 31744
    %v51 = vsel %vm49, %v35, 0
    %v54 = vsel %vm49, %v36, 0
    %vm56 = vcmask 1043456
    %v58 = vsel %vm56, %v34, 0
    %60 = vmatpush.msra.mxu0 0.0
    %61 = vmatpush.msra.mxu0 0.0
    %62 = vmatpush.msra.mxu0 0.0
    %63 = vmatpush.msra.mxu0 0.0
    %64 = vmatpush.msra.mxu0 0.0
    %65 = vmatpush.msra.mxu0 0.0
    %66 = vmatpush.msra.mxu0 0.0
    %67 = vmatpush.msra.mxu0 0.0
    %68 = vmatpush.msra.mxu0 0.0
    %69 = vmatpush.msra.mxu0 0.0
    %70 = vmatpush.msra.mxu0 0.0
    %71 = vmatpush.msra.mxu0 0.0
    %72 = vmatpush.msra.mxu0 0.0
    %73 = vmatpush.msra.mxu0 0.0
    %74 = vmatpush.msra.mxu0 0.0
    %75 = vmatpush.msra.mxu0 %v58
    %76 = vmatmul.f32.gmra.mxu0 %v51
    %v77 = vpop.f32.mrf.mxu0
    %v78 = vadd.f32 %v42, %v77
    %79 = vmatmul.f32.gmra.mxu0 %v54
    %v80 = vpop.f32.mrf.mxu0
    %v81 = vadd.f32 %v47, %v80
    %82 = vdwg.mxu0
    %v83 = vmax.f32 %v78, 0.0
    %v84 = vmax.f32 %v81, 0.0
    %v85 = vld [vmem:[%s3] sm:$0xff]
    %v86 = vld [vmem:[%s3 + $0x8] sm:$0xff]
    %v87 = vld [vmem:[%s3 + $0x10] sm:$0xff]
    %v88 = vld [vmem:[%s3 + $0x18] sm:$0xff]
    %v89 = vld [vmem:[%s4] sm:$0xff]
    %v90 = vld [vmem:[%s4 + $0x8] sm:$0xff]
    %v91 = vld [vmem:[%s4 + $0x10] sm:$0xff]
    %v92 = vld [vmem:[%s4 + $0x18] sm:$0xff]
    %94 = vset.pattern.permute.xlu0 0
    %95 = vperm.xlu0 %94, %v89
    %v96 = vpop.permute.xlu0 %95
    %99 = vset.pattern.permute.xlu0 0
    %100 = vperm.xlu0 %99, %v90
    %v101 = vpop.permute.xlu0 %100
    %104 = vset.pattern.permute.xlu0 0
    %105 = vperm.xlu0 %104, %v91
    %v106 = vpop.permute.xlu0 %105
    %109 = vset.pattern.permute.xlu0 0
    %110 = vperm.xlu0 %109, %v92
    %v111 = vpop.permute.xlu0 %110
    %vm113 = vcmask 130048
    %v115 = vsel %vm113, %v85, 0
    %v118 = vsel %vm113, %v86, 0
    %v121 = vsel %vm113, %v87, 0
    %v124 = vsel %vm113, %v88, 0
    %126 = vmatpush.msra.mxu0 0.0
    %127 = vmatpush.msra.mxu0 0.0
    %128 = vmatpush.msra.mxu0 0.0
    %129 = vmatpush.msra.mxu0 0.0
    %130 = vmatpush.msra.mxu0 0.0
    %131 = vmatpush.msra.mxu0 0.0
    %132 = vmatpush.msra.mxu0 0.0
    %133 = vmatpush.msra.mxu0 0.0
    %134 = vmatpush.msra.mxu0 0.0
    %135 = vmatpush.msra.mxu0 0.0
    %136 = vmatpush.msra.mxu0 0.0
    %137 = vmatpush.msra.mxu0 0.0
    %138 = vmatpush.msra.mxu0 0.0
    %139 = vmatpush.msra.mxu0 0.0
    %140 = vmatpush.msra.mxu0 %v84
    %141 = vmatpush.msra.mxu0 %v83
    %142 = vmatmul.f32.gmra.mxu0 %v115
    %v143 = vpop.f32.mrf.mxu0
    %v144 = vadd.f32 %v96, %v143
    %145 = vmatmul.f32.gmra.mxu0 %v118
    %v146 = vpop.f32.mrf.mxu0
    %v147 = vadd.f32 %v101, %v146
    %148 = vmatmul.f32.gmra.mxu0 %v121
    %v149 = vpop.f32.mrf.mxu0
    %v150 = vadd.f32 %v106, %v149
    %151 = vmatmul.f32.gmra.mxu0 %v124
    %v152 = vpop.f32.mrf.mxu0
    %v153 = vadd.f32 %v111, %v152
    %154 = vdwg.mxu0
    %v155 = vmax.f32 %v144, 0.0
    %v156 = vmax.f32 %v147, 0.0
    %v157 = vmax.f32 %v150, 0.0
    %v158 = vmax.f32 %v153, 0.0
    %v159 = vld [vmem:[%s5] sm:$0xff]
    %v160 = vld [vmem:[%s5 + $0x8] sm:$0xff]
    %v161 = vld [vmem:[%s5 + $0x10] sm:$0xff]
    %v162 = vld [vmem:[%s5 + $0x18] sm:$0xff]
    %v163 = vld [vmem:[%s6] sm:$0xff]
    %v164 = vld [vmem:[%s6 + $0x8] sm:$0xff]
    %v165 = vld [vmem:[%s6 + $0x10] sm:$0xff]
    %v166 = vld [vmem:[%s6 + $0x18] sm:$0xff]
    %168 = vset.pattern.permute.xlu0 0
    %169 = vperm.xlu0 %168, %v163
    %v170 = vpop.permute.xlu0 %169
    %173 = vset.pattern.permute.xlu0 0
    %174 = vperm.xlu0 %173, %v164
    %v175 = vpop.permute.xlu0 %174
    %178 = vset.pattern.permute.xlu0 0
    %179 = vperm.xlu0 %178, %v165
    %v180 = vpop.permute.xlu0 %179
    %183 = vset.pattern.permute.xlu0 0
    %184 = vperm.xlu0 %183, %v166
    %v185 = vpop.permute.xlu0 %184
    %vm187 = vcmask 261120
    %v189 = vsel %vm187, %v159, 0
    %v192 = vsel %vm187, %v160, 0
    %v195 = vsel %vm187, %v161, 0
    %v198 = vsel %vm187, %v162, 0
    %200 = vmatpush.msra.mxu0 0.0
    %201 = vmatpush.msra.mxu0 0.0
    %202 = vmatpush.msra.mxu0 0.0
    %203 = vmatpush.msra.mxu0 0.0
    %204 = vmatpush.msra.mxu0 0.0
    %205 = vmatpush.msra.mxu0 0.0
    %206 = vmatpush.msra.mxu0 0.0
    %207 = vmatpush.msra.mxu0 0.0
    %208 = vmatpush.msra.mxu0 0.0
    %209 = vmatpush.msra.mxu0 0.0
    %210 = vmatpush.msra.mxu0 0.0
    %211 = vmatpush.msra.mxu0 0.0
    %212 = vmatpush.msra.mxu0 %v158
    %213 = vmatpush.msra.mxu0 %v157
    %214 = vmatpush.msra.mxu0 %v156
    %215 = vmatpush.msra.mxu0 %v155
    %216 = vmatmul.f32.gmra.mxu0 %v189
    %v217 = vpop.f32.mrf.mxu0
    %v218 = vadd.f32 %v170, %v217
    %219 = vmatmul.f32.gmra.mxu0 %v192
    %v220 = vpop.f32.mrf.mxu0
    %v221 = vadd.f32 %v175, %v220
    %222 = vmatmul.f32.gmra.mxu0 %v195
    %v223 = vpop.f32.mrf.mxu0
    %v224 = vadd.f32 %v180, %v223
    %225 = vmatmul.f32.gmra.mxu0 %v198
    %v226 = vpop.f32.mrf.mxu0
    %v227 = vadd.f32 %v185, %v226
    %228 = vdwg.mxu0
    %v229 = vmul.f32 %v218, 0.5
    %v230 = vmul.f32 %v221, 0.5
    %v231 = vmul.f32 %v224, 0.5
    %v232 = vmul.f32 %v227, 0.5
    %v233 = vtanh.pop %v229
    %v234 = vtanh.pop %v230
    %v235 = vtanh.pop %v231
    %v236 = vtanh.pop %v232
    %v237 = vmul.f32 %v233, 0.5
    %v238 = vmul.f32 %v234, 0.5
    %v239 = vmul.f32 %v235, 0.5
    %v240 = vmul.f32 %v236, 0.5
    %v241 = vadd.f32 %v237, 0.5
    %v242 = vadd.f32 %v238, 0.5
    %v243 = vadd.f32 %v239, 0.5
    %v244 = vadd.f32 %v240, 0.5
    %245 = vst [vmem:[#allocation2] sm:$0xff] %v241
    %246 = vst [vmem:[#allocation2 + $0x8] sm:$0xff] %v242
    %247 = vst [vmem:[#allocation2 + $0x10] sm:$0xff] %v243
    %248 = vst [vmem:[#allocation2 + $0x18] sm:$0xff] %v244
    %v249 = vld [vmem:[%s7] sm:$0xff]
    %v250 = vld [vmem:[%s7 + $0x8] sm:$0x1]
    %v252 = vsel %vm187, %v249, 0
    %v255 = vsel %vm187, %v250, 0
    %257 = vmatpush.msra.mxu0 0.0
    %258 = vmatpush.msra.mxu0 0.0
    %259 = vmatpush.msra.mxu0 0.0
    %260 = vmatpush.msra.mxu0 0.0
    %261 = vmatpush.msra.mxu0 0.0
    %262 = vmatpush.msra.mxu0 0.0
    %263 = vmatpush.msra.mxu0 0.0
    %264 = vmatpush.msra.mxu0 0.0
    %265 = vmatpush.msra.mxu0 0.0
    %266 = vmatpush.msra.mxu0 0.0
    %267 = vmatpush.msra.mxu0 0.0
    %268 = vmatpush.msra.mxu0 0.0
    %269 = vmatpush.msra.mxu0 %v244
    %270 = vmatpush.msra.mxu0 %v243
    %271 = vmatpush.msra.mxu0 %v242
    %272 = vmatpush.msra.mxu0 %v241
    %273 = vmatmul.f32.gmra.mxu0 %v252
    %v274 = vpop.f32.mrf.mxu0
    %v275 = vadd.f32 0.0, %v274
    %276 = vmatmul.f32.gmra.mxu0 %v255
    %v277 = vpop.f32.mrf.mxu0
    %v278 = vadd.f32 0.0, %v277
    %279 = vdwg.mxu0
    %v280 = vmul.f32 %v241, %v241
    %v281 = vmul.f32 %v242, %v242
    %v282 = vmul.f32 %v243, %v243
    %v283 = vmul.f32 %v244, %v244
    %v284 = vadd.f32 %v280, %v281
    %v285 = vadd.f32 %v284, %v282
    %v286 = vadd.f32 %v285, %v283
    %v287 = vrot.slane %v286, 4
    %v288 = vadd.f32 %v286, %v287
    %v289 = vrot.slane %v288, 2
    %v290 = vadd.f32 %v288, %v289
    %v291 = vrot.slane %v290, 1
    %v292 = vadd.f32 %v290, %v291
    %v293 = vmax.f32 %v292, 1e-16
    %v294 = vrsqrt.pop %v293
    %v295 = vmul.f32 %v294, %v293
    %v296 = vmul.f32 %v295, %v294
    %v297 = vmul.f32 0.5, %v296
    %v298 = vsub.f32 1.5, %v297
    %v299 = vmul.f32 %v294, %v298
    %vm300 = vweird.f32 %v293
    %vm301 = vweird.f32 %v294
    %vm302 = vmor %vm300, %vm301
    %v303 = vsel %vm302, %v294, %v299
    %v304 = vmul.f32 %v275, %v303
    %v305 = vadd.f32 %v304, 1.0
    %306 = vst [vmem:[#allocation4] sm:$0xff] %v305
    %v307 = vmul.f32 %v278, %v303
    %v308 = vadd.f32 %v307, 8.0
    %v309 = vperm.slane %v308, 0
    %v310 = vmul.f32 %v241, %v309
    %v311 = vmul.f32 %v242, %v309
    %v312 = vmul.f32 %v243, %v309
    %v313 = vmul.f32 %v244, %v309
    %314 = vst [vmem:[#allocation6] sm:$0xff] %v310
    %315 = vst [vmem:[#allocation6 + $0x8] sm:$0xff] %v311
    %316 = vst [vmem:[#allocation6 + $0x10] sm:$0xff] %v312
    %317 = vst [vmem:[#allocation6 + $0x18] sm:$0xff] %v313
    // Predicated region
    $region34: #{tpu_custom_call.1} parent=1 // pred_check
      _
    $region35: #{tpu_custom_call.1} parent=1 // pred_check_branch
      %319 = sbr.rel (0) target = $region37
    $region36: #{tpu_custom_call.1} parent=1 // pred_region
      %321 = vsyncadd [#allocation3], 0
      %s322 = sshll.u32 [#allocation2], 4
      %s323 = int_to_ptr.vmem [resolvable:$true] %s322
      %s324 = sshll.u32 %s8, 4
      %s325 = int_to_ptr.hbm [resolvable:$true] %s324
      %330 = dma.vmem_to_hbm [thread:$0]  %s323, 512, %s325, [#allocation3], 128, 128, 8
    $region37: #{tpu_custom_call.1} parent=1 // pred_fallthru
      _
    // Predicated region
    $region38: #{tpu_custom_call.1} parent=1 // pred_check
      _
    $region39: #{tpu_custom_call.1} parent=1 // pred_check_branch
      %332 = sbr.rel (0) target = $region41
    $region40: #{tpu_custom_call.1} parent=1 // pred_region
      %334 = vsyncadd [#allocation5], 0
      %s336 = sshll.u32 [#allocation4], 4
      %s337 = int_to_ptr.vmem [resolvable:$true] %s336
      %s338 = sshll.u32 %s9, 4
      %s339 = int_to_ptr.hbm [resolvable:$true] %s338
      %341 = dma.vmem_to_hbm [thread:$0]  %s337, 128, %s339, [#allocation5]
    $region41: #{tpu_custom_call.1} parent=1 // pred_fallthru
      _
    // Predicated region
    $region42: #{tpu_custom_call.1} parent=1 // pred_check
      _
    $region43: #{tpu_custom_call.1} parent=1 // pred_check_branch
      %343 = sbr.rel (0) target = $region45
    $region44: #{tpu_custom_call.1} parent=1 // pred_region
      %345 = vsyncadd [#allocation5], 0
      %s346 = sshll.u32 [#allocation6], 4
      %s347 = int_to_ptr.vmem [resolvable:$true] %s346
      %s348 = sshll.u32 %s10, 4
      %s349 = int_to_ptr.hbm [resolvable:$true] %s348
      %354 = dma.vmem_to_hbm [thread:$0]  %s347, 512, %s349, [#allocation5], 128, 128, 8
    $region45: #{tpu_custom_call.1} parent=1 // pred_fallthru
      _
    // Predicated region
    $region46: #{tpu_custom_call.1} parent=1 // pred_check
      _
    $region47: #{tpu_custom_call.1} parent=1 // pred_check_branch
      %356 = sbr.rel (0) target = $region49
    $region48: #{tpu_custom_call.1} parent=1 // pred_region
      %358 = dma.done [#allocation3], 512
    $region49: #{tpu_custom_call.1} parent=1 // pred_fallthru
      _
    // Predicated region
    $region50: #{tpu_custom_call.1} parent=1 // pred_check
      _
    $region51: #{tpu_custom_call.1} parent=1 // pred_check_branch
      %360 = sbr.rel (0) target = $region53
    $region52: #{tpu_custom_call.1} parent=1 // pred_region
      %362 = dma.done [#allocation5], 128
    $region53: #{tpu_custom_call.1} parent=1 // pred_fallthru
      _
    // Predicated region
    $region54: #{tpu_custom_call.1} parent=1 // pred_check
      _
    $region55: #{tpu_custom_call.1} parent=1 // pred_check_branch
      %364 = sbr.rel (0) target = $region57
    $region56: #{tpu_custom_call.1} parent=1 // pred_region
      %366 = dma.done [#allocation5], 512
    $region57: #{tpu_custom_call.1} parent=1 // pred_fallthru
      _
    %367 = vsyncpa [#allocation3], 1
    %368 = vsyncpa [#allocation5], 1

</llo_original>
